<compile_context>
chip_gen: v7x
topology: tpu7x:2x2x1
jax: 0.10.0
libtpu: 0.0.40
codegen_flags: <defaults>
</compile_context>

<pallas_src>
import functools

import jax
import jax.numpy as jnp
import numpy as np
from jax.experimental import pallas as pl
from jax.experimental.pallas import tpu as pltpu

_LANE = 128
_ROW_ALIGN = 16            # covers bf16 (16,128) and f32 (8,128) native tiles


def _round_up(x, m):
    return ((x + m - 1) // m) * m


def _ceil_div(a, b):
    return -(-a // b)


def _vmem_limit_bytes():
    """Scoped-VMEM limit derived from the chip (v5e/v6e: 128 MiB, v7x: 64 MiB)."""
    cap = None
    try:
        cap = getattr(pltpu.get_tpu_info(), "vmem_capacity_bytes", None)
    except Exception:
        cap = None
    if not cap:
        cap = 64 * 1024 * 1024           # assume the smallest (v7x) if unknown
    return int(max(32 * 1024 * 1024, int(cap) - 16 * 1024 * 1024))


# --------- pass 1 (BN): matmul + cross-tile batch-stat reduction -------------
# grid = (k_out tiles ["parallel"], row tiles ["arbitrary"])
def _bn_stats_kernel(x_ref, wt_ref, gamma_ref, beta_ref, *refs,
                     n_rows, eps, store_y):
    if store_y:
        y_ref, scale_ref, shift_ref, sum_ref, sq_ref = refs
    else:
        scale_ref, shift_ref, sum_ref, sq_ref = refs
    i = pl.program_id(1)

    @pl.when(i == 0)
    def _init():
        sum_ref[...] = jnp.zeros_like(sum_ref)
        sq_ref[...] = jnp.zeros_like(sq_ref)

    # y = x @ W^T (bias-free: the linear bias cancels under training-mode BN).
    # Padded rows / channels are zero, so they contribute nothing to the stats.
    y = jnp.dot(x_ref[...], wt_ref[...], preferred_element_type=jnp.float32)
    if store_y:
        y_ref[...] = y.astype(y_ref.dtype)            # bf16 round-trip
    # Column sums / sums-of-squares in f32. (If profiling ever shows the VALU /
    # x-lane slots binding at small K, the plain sum can move onto the MXU via
    # a ones-row matmul; hidden under the matmul at large K.)
    sum_ref[...] += jnp.sum(y, axis=0, keepdims=True)
    sq_ref[...] += jnp.sum(y * y, axis=0, keepdims=True)

    @pl.when(i == pl.num_programs(1) - 1)
    def _finalize():
        inv_n = 1.0 / float(n_rows)                   # true (unpadded) rows
        mean = sum_ref[...] * inv_n
        # TODO(synk): E[y^2]-E[y]^2 in f32 is cancellation-prone if |mean|>>std;
        # switch to Chan's centered partial sums if that regime ever matters.
        var = jnp.maximum(sq_ref[...] * inv_n - mean * mean, 0.0)
        scale = gamma_ref[...] * jax.lax.rsqrt(var + eps)
        shift = beta_ref[...] - mean * scale          # bias cancels -> no bias
        scale_ref[...] = scale
        shift_ref[...] = shift


# --------- pass 2 (BN, small/medium k_in): recompute y, apply BN/ReLU --------
# grid = (k_out tiles ["parallel"], row tiles ["parallel"])
def _bn_apply_recompute_kernel(x_ref, wt_ref, scale_ref, shift_ref, *refs,
                               residual):
    if residual:
        xr_ref, o_ref = refs
    else:
        (o_ref,) = refs
    y = jnp.dot(x_ref[...], wt_ref[...], preferred_element_type=jnp.float32)
    y = jnp.maximum(y * scale_ref[...] + shift_ref[...], 0.0)
    if residual:
        y = y + xr_ref[...].astype(jnp.float32)
    o_ref[...] = y.astype(o_ref.dtype)


# --------- pass 2 (BN, large k_in): apply scale/shift/ReLU to stored bf16 y --
# grid = (row tiles ["parallel"]); full-k_out, multi-MiB lane-dense blocks
def _bn_apply_stored_kernel(y_ref, scale_ref, shift_ref, *refs, residual):
    if residual:
        xr_ref, o_ref = refs
    else:
        (o_ref,) = refs
    y = y_ref[...].astype(jnp.float32) * scale_ref[...] + shift_ref[...]
    y = jnp.maximum(y, 0.0)
    if residual:
        y = y + xr_ref[...].astype(jnp.float32)
    o_ref[...] = y.astype(o_ref.dtype)


# --------- fused single pass for use_bn=False ---------------------------------
def _fc_relu_kernel(x_ref, wt_ref, bias_ref, *refs, residual):
    if residual:
        xr_ref, o_ref = refs
    else:
        (o_ref,) = refs
    y = jnp.dot(x_ref[...], wt_ref[...], preferred_element_type=jnp.float32)
    y = jnp.maximum(y + bias_ref[...], 0.0)
    if residual:
        y = y + xr_ref[...].astype(jnp.float32)
    o_ref[...] = y.astype(o_ref.dtype)


# --------- parameter prep (hoisted out of the per-call path) ------------------
def prepare_fc_params(weight, bias, gamma=None, beta=None,
                      *, matmul_dtype=jnp.bfloat16):
    """One-time prep: transpose weight, pad channels to 128 lanes, cast to bf16."""
    k_out, k_in = weight.shape
    k_in_p = _round_up(k_in, _LANE)
    k_out_p = _round_up(k_out, _LANE)

    w_t = jnp.asarray(weight, jnp.float32).T                      # (k_in, k_out)
    w_t = jnp.pad(w_t, ((0, k_in_p - k_in), (0, k_out_p - k_out)))
    w_t = w_t.astype(matmul_dtype)

    def _row(v, fill):
        if v is None:
            v = jnp.full((k_out,), fill, jnp.float32)
        v = jnp.asarray(v, jnp.float32).reshape(1, k_out)
        return jnp.pad(v, ((0, 0), (0, k_out_p - k_out)))

    return dict(w_t=w_t, bias=_row(bias, 0.0), gamma=_row(gamma, 1.0),
                beta=_row(beta, 0.0), k_in=k_in, k_out=k_out,
                k_in_p=k_in_p, k_out_p=k_out_p, matmul_dtype=matmul_dtype)


def fc_layer_forward(x, params, *, use_bn=True, eps=1e-5, out_dtype=None,
                     recompute_max_k_in=1536, target_rows=1024):
    """JAX/Pallas equivalent of FCLayer.forward (training-mode BatchNorm)."""
    k_in, k_out = params["k_in"], params["k_out"]
    k_in_p, k_out_p = params["k_in_p"], params["k_out_p"]
    matmul_dtype = params["matmul_dtype"]
    residual = (k_in == k_out)
    out_dtype = jnp.float32 if out_dtype is None else out_dtype
    out_size = np.dtype(out_dtype).itemsize
    mm_size = np.dtype(matmul_dtype).itemsize

    lead = x.shape[:-1]
    n = int(np.prod(lead)) if lead else 1

    vmem_limit = _vmem_limit_bytes()
    budget = vmem_limit - 4 * 1024 * 1024             # slack for Mosaic scratch

    # Recompute-y beats the bf16 y round-trip roughly while 2*k_in MACs/elt is
    # cheaper than ~4 B/elt of HBM (~1000 on v5e, ~1200 on v7x, ~2500 on v6e).
    recompute = bool(use_bn) and (k_in <= recompute_max_k_in)

    # ---- column tile: prefer 512/256 (full 256-wide MXU passes on v6e/v7x) ---
    tile_c = 128
    for c in (512, 256):
        if k_out_p % c == 0:
            tile_c = c
            break

    def _per_row_and_fixed(tc):
        # Bytes that scale with tile_n (double-buffered streams) + fixed bytes.
        per_row = 2 * k_in_p * mm_size                # x (full K), 2 buffers
        if use_bn and not recompute:
            per_row += 2 * tc * mm_size               # pass-1 bf16 y store
        else:
            per_row += 2 * tc * out_size              # output tile
            if residual:
                per_row += 2 * tc * mm_size           # bf16 residual slice
        fixed = 2 * k_in_p * tc * mm_size             # weight block, 2 buffers
        fixed += 16 * tc * 4                          # gamma/beta/scale/shift/scratch
        return per_row, fixed

    per_row, fixed = _per_row_and_fixed(tile_c)
    while tile_c > 128 and fixed + per_row * _ROW_ALIGN > budget:
        tile_c //= 2
        per_row, fixed = _per_row_and_fixed(tile_c)
    # TODO(synk): add a K (k_in) grid axis with an f32 VMEM accumulator if even
    # the minimal footprint above exceeds the budget (k_in_p ~ 100k).

    max_rows = max(_ROW_ALIGN,
                   min(target_rows, max(budget - fixed, 0) // per_row))
    max_rows = max(_ROW_ALIGN, (max_rows // _ROW_ALIGN) * _ROW_ALIGN)

    # Rebalance the row tile against n so padding waste is bounded per tile.
    r_tiles = _ceil_div(n, max_rows)
    tile_n = _round_up(_ceil_div(n, r_tiles), _ROW_ALIGN)
    r_tiles = _ceil_div(n, tile_n)
    n_pad = tile_n * r_tiles
    c_tiles = k_out_p // tile_c

    # Stored-y pass 2 is purely HBM-bound: decouple its row tile so each block
    # is multi-MiB (full k_out width, lane-dense).
    tile_n2 = tile_n
    r2_tiles = r_tiles
    if use_bn and not recompute:
        per_row2 = 2 * k_out_p * (mm_size + out_size)
        if residual:
            per_row2 += 2 * k_out_p * mm_size
        rows2_budget = max(_ROW_ALIGN, budget // per_row2)
        rows2_target = max(_ROW_ALIGN, (4 * 1024 * 1024) // (k_out_p * mm_size))
        mult = max(1, min(r_tiles, rows2_budget // tile_n,
                          rows2_target // tile_n))
        tile_n2 = tile_n * mult
        n_pad = _round_up(n, tile_n2)                 # divisible by both tiles
        r_tiles = n_pad // tile_n
        r2_tiles = n_pad // tile_n2

    # ---- pad + cast once: x streams as bf16 for both matmul and residual -----
    x2d = x.reshape(n, k_in)
    x_mm = jnp.pad(x2d.astype(matmul_dtype),
                   ((0, n_pad - n), (0, k_in_p - k_in)))

    x_spec = pl.BlockSpec((tile_n, k_in_p), lambda c, i: (i, 0))
    w_spec = pl.BlockSpec((k_in_p, tile_c), lambda c, i: (0, c))
    vec_spec = pl.BlockSpec((1, tile_c), lambda c, i: (0, c))
    col_spec = pl.BlockSpec((tile_n, tile_c), lambda c, i: (i, c))

    cparams_reduce = pltpu.CompilerParams(
        dimension_semantics=("parallel", "arbitrary"),
        vmem_limit_bytes=vmem_limit)
    cparams_par2 = pltpu.CompilerParams(
        dimension_semantics=("parallel", "parallel"),
        vmem_limit_bytes=vmem_limit)

    if use_bn:
        stats_out_shapes = (jax.ShapeDtypeStruct((1, k_out_p), jnp.float32),
                            jax.ShapeDtypeStruct((1, k_out_p), jnp.float32))
        stats_out_specs = (vec_spec, vec_spec)
        if not recompute:
            stats_out_shapes = (
                jax.ShapeDtypeStruct((n_pad, k_out_p), matmul_dtype),
            ) + stats_out_shapes
            stats_out_specs = (col_spec,) + stats_out_specs

        stats_out = pl.pallas_call(
            functools.partial(_bn_stats_kernel, n_rows=n, eps=float(eps),
                              store_y=not recompute),
            out_shape=stats_out_shapes,
            grid=(c_tiles, r_tiles),
            in_specs=[x_spec, w_spec, vec_spec, vec_spec],
            out_specs=stats_out_specs,
            scratch_shapes=[pltpu.VMEM((1, tile_c), jnp.float32),
                            pltpu.VMEM((1, tile_c), jnp.float32)],
            compiler_params=cparams_reduce,
        )(x_mm, params["w_t"], params["gamma"], params["beta"])

        if recompute:
            scale, shift = stats_out
            in_specs = [x_spec, w_spec, vec_spec, vec_spec]
            operands = [x_mm, params["w_t"], scale, shift]
            if residual:                               # k_in_p == k_out_p here
                in_specs.append(col_spec)
                operands.append(x_mm)
            out_pad = pl.pallas_call(
                functools.partial(_bn_apply_recompute_kernel,
                                  residual=residual),
                out_shape=jax.ShapeDtypeStruct((n_pad, k_out_p), out_dtype),
                grid=(c_tiles, r_tiles),
                in_specs=in_specs,
                out_specs=col_spec,
                compiler_params=cparams_par2,
            )(*operands)
        else:
            y_lin, scale, shift = stats_out
            row2_spec = pl.BlockSpec((tile_n2, k_out_p), lambda i: (i, 0))
            full_vec_spec = pl.BlockSpec((1, k_out_p), lambda i: (0, 0))
            in_specs = [row2_spec, full_vec_spec, full_vec_spec]
            operands = [y_lin, scale, shift]
            if residual:
                in_specs.append(row2_spec)
                operands.append(x_mm)
            out_pad = pl.pallas_call(
                functools.partial(_bn_apply_stored_kernel, residual=residual),
                out_shape=jax.ShapeDtypeStruct((n_pad, k_out_p), out_dtype),
                grid=(r2_tiles,),
                in_specs=in_specs,
                out_specs=row2_spec,
                compiler_params=pltpu.CompilerParams(
                    dimension_semantics=("parallel",),
                    vmem_limit_bytes=vmem_limit),
            )(*operands)
    else:
        in_specs = [x_spec, w_spec, vec_spec]
        operands = [x_mm, params["w_t"], params["bias"]]
        if residual:
            in_specs.append(col_spec)
            operands.append(x_mm)
        out_pad = pl.pallas_call(
            functools.partial(_fc_relu_kernel, residual=residual),
            out_shape=jax.ShapeDtypeStruct((n_pad, k_out_p), out_dtype),
            grid=(c_tiles, r_tiles),
            in_specs=in_specs,
            out_specs=col_spec,
            compiler_params=cparams_par2,
        )(*operands)

    return out_pad[:n, :k_out].reshape(*lead, k_out)


# --------- pure-JAX reference (mirrors the PyTorch module, f32) ---------------
def _reference_forward(x, weight, bias, gamma, beta, *, use_bn=True, eps=1e-5):
    k_out, k_in = weight.shape
    lead = x.shape[:-1]
    x2d = x.reshape(-1, k_in).astype(jnp.float32)
    y = x2d @ jnp.asarray(weight, jnp.float32).T + bias
    if use_bn:
        mean = jnp.mean(y, axis=0, keepdims=True)
        var = jnp.mean((y - mean) ** 2, axis=0, keepdims=True)
        y = gamma * (y - mean) / jnp.sqrt(var + eps) + beta
    y = jnp.maximum(y, 0.0)
    y = y.reshape(*lead, k_out)
    if k_in == k_out:
        y = y + x
    return y


if __name__ == "__main__":
    # Small shapes: batch=2, seq=8, hidden(k_in=k_out)=32 -> residual branch on.
    batch, seq, k_in = 2, 8, 32
    k_out = k_in

    key = jax.random.PRNGKey(0)
    kx, kw, kb = jax.random.split(key, 3)

    x = jax.random.normal(kx, (batch, seq, k_in), dtype=jnp.float32)

    bound = 1.0 / np.sqrt(k_in)
    weight = jax.random.uniform(kw, (k_out, k_in), jnp.float32, -bound, bound)
    bias = jax.random.uniform(kb, (k_out,), jnp.float32, -bound, bound)
    gamma = jnp.ones((k_out,), jnp.float32)
    beta = jnp.zeros((k_out,), jnp.float32)

    params = prepare_fc_params(weight, bias, gamma, beta)
    ref = _reference_forward(x, weight, bias, gamma, beta, use_bn=True)

    # --- BN + residual, recompute-y path (small k_in) -------------------------
    out = jax.block_until_ready(fc_layer_forward(x, params, use_bn=True))
    np.testing.assert_allclose(np.asarray(out), np.asarray(ref),
                               rtol=2e-2, atol=2e-2)   # bf16 matmul tolerance
    assert out.shape == (batch, seq, k_out)

    # --- BN + residual, stored-bf16-y path (forced, exercises large-k_in code)
    out_s = jax.block_until_ready(
        fc_layer_forward(x, params, use_bn=True, recompute_max_k_in=0))
    np.testing.assert_allclose(np.asarray(out_s), np.asarray(ref),
                               rtol=2e-2, atol=2e-2)
    assert out_s.shape == (batch, seq, k_out)

    # --- no-BN, non-residual path (fused single-pass kernel) ------------------
    k_out2 = 64
    kw2, kb2 = jax.random.split(kw)
    w2 = jax.random.uniform(kw2, (k_out2, k_in), jnp.float32, -bound, bound)
    b2 = jax.random.uniform(kb2, (k_out2,), jnp.float32, -bound, bound)
    params2 = prepare_fc_params(w2, b2)
    out2 = jax.block_until_ready(fc_layer_forward(x, params2, use_bn=False))
    ref2 = _reference_forward(x, w2, b2, None, None, use_bn=False)
    np.testing.assert_allclose(np.asarray(out2), np.asarray(ref2),
                               rtol=2e-2, atol=2e-2)
    assert out2.shape == (batch, seq, k_out2)

    print("KERNEL_OK")
</pallas_src>

<mosaic_0001>
module attributes {stable_mosaic.version = 11 : i64} {
  func.func @_bn_stats_kernel(%arg0: i32, %arg1: i32, %arg2: memref<16x128xbf16, #tpu.memory_space<vmem>>, %arg3: memref<128x128xbf16, #tpu.memory_space<vmem>>, %arg4: memref<1x128xf32, #tpu.memory_space<vmem>>, %arg5: memref<1x128xf32, #tpu.memory_space<vmem>>, %arg6: memref<1x128xf32, #tpu.memory_space<vmem>>, %arg7: memref<1x128xf32, #tpu.memory_space<vmem>>, %arg8: memref<1x128xf32, #tpu.memory_space<vmem>>, %arg9: memref<1x128xf32, #tpu.memory_space<vmem>>) attributes {dimension_semantics = [#tpu.dimension_semantics<parallel>, #tpu.dimension_semantics<arbitrary>], iteration_bounds = array<i64: 1, 1>, scalar_prefetch = 0 : i64, scratch_operands = 2 : i64, tpu.core_type = #tpu.core_type<tc>, window_params = [{transform_indices = @transform_0, window_bounds = array<i64: 16, 128>}, {transform_indices = @transform_1, window_bounds = array<i64: 128, 128>}, {transform_indices = @transform_2, window_bounds = array<i64: 1, 128>}, {transform_indices = @transform_3, window_bounds = array<i64: 1, 128>}, {transform_indices = @transform_4, window_bounds = array<i64: 1, 128>}, {transform_indices = @transform_5, window_bounds = array<i64: 1, 128>}]} {
    %c0_i32 = arith.constant 0 : i32
    %0 = arith.cmpi eq, %arg1, %c0_i32 : i32
    %1 = arith.extui %0 : i1 to i32
    %c0_i32_0 = arith.constant 0 : i32
    %2 = arith.cmpi ne, %1, %c0_i32_0 : i32
    scf.if %2 {
      %cst_16 = arith.constant 0.000000e+00 : f32
      %20 = vector.broadcast %cst_16 : f32 to vector<1x128xf32>
      %c0_17 = arith.constant 0 : index
      %c0_18 = arith.constant 0 : index
      %21 = vector.load %arg8[%c0_17, %c0_18] : memref<1x128xf32, #tpu.memory_space<vmem>>, vector<1x128xf32>
      tpu.vector_store %arg8[%c0_17, %c0_18], %20 {strides = array<i32>} : memref<1x128xf32, #tpu.memory_space<vmem>>, vector<1x128xf32>,
      %cst_19 = arith.constant 0.000000e+00 : f32
      %22 = vector.broadcast %cst_19 : f32 to vector<1x128xf32>
      %c0_20 = arith.constant 0 : index
      %c0_21 = arith.constant 0 : index
      %23 = vector.load %arg9[%c0_20, %c0_21] : memref<1x128xf32, #tpu.memory_space<vmem>>, vector<1x128xf32>
      tpu.vector_store %arg9[%c0_20, %c0_21], %22 {strides = array<i32>} : memref<1x128xf32, #tpu.memory_space<vmem>>, vector<1x128xf32>,
    } else {
    }
    %c0 = arith.constant 0 : index
    %c0_1 = arith.constant 0 : index
    %3 = vector.load %arg2[%c0, %c0_1] : memref<16x128xbf16, #tpu.memory_space<vmem>>, vector<16x128xbf16>
    %c0_2 = arith.constant 0 : index
    %c0_3 = arith.constant 0 : index
    %4 = vector.load %arg3[%c0_2, %c0_3] : memref<128x128xbf16, #tpu.memory_space<vmem>>, vector<128x128xbf16>
    %cst = arith.constant dense<0.000000e+00> : vector<16x128xf32>
    %5 = tpu.matmul %3, %4, %cst {dimension_numbers = #tpu.dot_dimension_numbers<[1], [0], [0], [1], [0, 0, 1, 1], [], []>} : vector<16x128xbf16>, vector<128x128xbf16>, vector<16x128xf32> -> vector<16x128xf32>
    %c0_4 = arith.constant 0 : index
    %c0_5 = arith.constant 0 : index
    %6 = vector.load %arg8[%c0_4, %c0_5] : memref<1x128xf32, #tpu.memory_space<vmem>>, vector<1x128xf32>
    %cst_6 = arith.constant dense<0.000000e+00> : vector<128xf32>
    %7 = vector.multi_reduction <add>, %5, %cst_6 [0] : vector<16x128xf32> to vector<128xf32>
    %8 = vector.shape_cast %7 : vector<128xf32> to vector<1x128xf32>
    %9 = arith.addf %6, %8 : vector<1x128xf32>
    %c0_7 = arith.constant 0 : index
    %c0_8 = arith.constant 0 : index
    %10 = vector.load %arg8[%c0_7, %c0_8] : memref<1x128xf32, #tpu.memory_space<vmem>>, vector<1x128xf32>
    tpu.vector_store %arg8[%c0_7, %c0_8], %9 {strides = array<i32>} : memref<1x128xf32, #tpu.memory_space<vmem>>, vector<1x128xf32>,
    %c0_9 = arith.constant 0 : index
    %c0_10 = arith.constant 0 : index
    %11 = vector.load %arg9[%c0_9, %c0_10] : memref<1x128xf32, #tpu.memory_space<vmem>>, vector<1x128xf32>
    %12 = arith.mulf %5, %5 : vector<16x128xf32>
    %cst_11 = arith.constant dense<0.000000e+00> : vector<128xf32>
    %13 = vector.multi_reduction <add>, %12, %cst_11 [0] : vector<16x128xf32> to vector<128xf32>
    %14 = vector.shape_cast %13 : vector<128xf32> to vector<1x128xf32>
    %15 = arith.addf %11, %14 : vector<1x128xf32>
    %c0_12 = arith.constant 0 : index
    %c0_13 = arith.constant 0 : index
    %16 = vector.load %arg9[%c0_12, %c0_13] : memref<1x128xf32, #tpu.memory_space<vmem>>, vector<1x128xf32>
    tpu.vector_store %arg9[%c0_12, %c0_13], %15 {strides = array<i32>} : memref<1x128xf32, #tpu.memory_space<vmem>>, vector<1x128xf32>,
    %c0_i32_14 = arith.constant 0 : i32
    %17 = arith.cmpi eq, %arg1, %c0_i32_14 : i32
    %18 = arith.extui %17 : i1 to i32
    %c0_i32_15 = arith.constant 0 : i32
    %19 = arith.cmpi ne, %18, %c0_i32_15 : i32
    scf.if %19 {
      %c0_16 = arith.constant 0 : index
      %c0_17 = arith.constant 0 : index
      %20 = vector.load %arg8[%c0_16, %c0_17] : memref<1x128xf32, #tpu.memory_space<vmem>>, vector<1x128xf32>
      %cst_18 = arith.constant 6.250000e-02 : f32
      %21 = vector.broadcast %cst_18 : f32 to vector<1x128xf32>
      %22 = arith.mulf %20, %21 : vector<1x128xf32>
      %c0_19 = arith.constant 0 : index
      %c0_20 = arith.constant 0 : index
      %23 = vector.load %arg9[%c0_19, %c0_20] : memref<1x128xf32, #tpu.memory_space<vmem>>, vector<1x128xf32>
      %cst_21 = arith.constant 6.250000e-02 : f32
      %24 = vector.broadcast %cst_21 : f32 to vector<1x128xf32>
      %25 = arith.mulf %23, %24 : vector<1x128xf32>
      %26 = arith.mulf %22, %22 : vector<1x128xf32>
      %27 = arith.subf %25, %26 : vector<1x128xf32>
      %cst_22 = arith.constant 0.000000e+00 : f32
      %28 = vector.broadcast %cst_22 : f32 to vector<1x128xf32>
      %29 = arith.maximumf %27, %28 : vector<1x128xf32>
      %c0_23 = arith.constant 0 : index
      %c0_24 = arith.constant 0 : index
      %30 = vector.load %arg4[%c0_23, %c0_24] : memref<1x128xf32, #tpu.memory_space<vmem>>, vector<1x128xf32>
      %cst_25 = arith.constant 9.99999974E-6 : f32
      %31 = vector.broadcast %cst_25 : f32 to vector<1x128xf32>
      %32 = arith.addf %29, %31 : vector<1x128xf32>
      %33 = math.rsqrt %32 : vector<1x128xf32>
      %34 = arith.mulf %30, %33 : vector<1x128xf32>
      %c0_26 = arith.constant 0 : index
      %c0_27 = arith.constant 0 : index
      %35 = vector.load %arg5[%c0_26, %c0_27] : memref<1x128xf32, #tpu.memory_space<vmem>>, vector<1x128xf32>
      %36 = arith.mulf %22, %34 : vector<1x128xf32>
      %37 = arith.subf %35, %36 : vector<1x128xf32>
      %c0_28 = arith.constant 0 : index
      %c0_29 = arith.constant 0 : index
      %38 = vector.load %arg6[%c0_28, %c0_29] : memref<1x128xf32, #tpu.memory_space<vmem>>, vector<1x128xf32>
      tpu.vector_store %arg6[%c0_28, %c0_29], %34 {strides = array<i32>} : memref<1x128xf32, #tpu.memory_space<vmem>>, vector<1x128xf32>,
      %c0_30 = arith.constant 0 : index
      %c0_31 = arith.constant 0 : index
      %39 = vector.load %arg7[%c0_30, %c0_31] : memref<1x128xf32, #tpu.memory_space<vmem>>, vector<1x128xf32>
      tpu.vector_store %arg7[%c0_30, %c0_31], %37 {strides = array<i32>} : memref<1x128xf32, #tpu.memory_space<vmem>>, vector<1x128xf32>,
    } else {
    }
    return
  }
  func.func @transform_0(%arg0: i32, %arg1: i32) -> (i32, i32) {
    %c0_i32 = arith.constant 0 : i32
    %c0_i32_0 = arith.constant 0 : i32
    return %arg1, %c0_i32 : i32, i32
  }
  func.func @transform_1(%arg0: i32, %arg1: i32) -> (i32, i32) {
    %c0_i32 = arith.constant 0 : i32
    %c0_i32_0 = arith.constant 0 : i32
    return %c0_i32, %arg0 : i32, i32
  }
  func.func @transform_2(%arg0: i32, %arg1: i32) -> (i32, i32) {
    %c0_i32 = arith.constant 0 : i32
    %c0_i32_0 = arith.constant 0 : i32
    return %c0_i32, %arg0 : i32, i32
  }
  func.func @transform_3(%arg0: i32, %arg1: i32) -> (i32, i32) {
    %c0_i32 = arith.constant 0 : i32
    %c0_i32_0 = arith.constant 0 : i32
    return %c0_i32, %arg0 : i32, i32
  }
  func.func @transform_4(%arg0: i32, %arg1: i32) -> (i32, i32) {
    %c0_i32 = arith.constant 0 : i32
    %c0_i32_0 = arith.constant 0 : i32
    return %c0_i32, %arg0 : i32, i32
  }
  func.func @transform_5(%arg0: i32, %arg1: i32) -> (i32, i32) {
    %c0_i32 = arith.constant 0 : i32
    %c0_i32_0 = arith.constant 0 : i32
    return %c0_i32, %arg0 : i32, i32
  }
}

</mosaic_0001>

<llo_original>
// kernel: tpu_custom_call.1
$region0: #{tpu_custom_call.1}
  #allocation0 [shape = 'u32[]', space=smem, size = 0x4, offset = 0x4, fixed_abs, tag = 'smem constant byte address 0x4 - core index']
  #allocation1 [shape = 'u32[144,128]{1,0:T(1,128)}', space=vmem, size = 0x12000, scoped, tag = 'internal scratch']
  #allocation2 [shape = 'f32[1,128]{1,0:T(1,128)}', space=vmem, size = 0x200, scoped, tag = 'scratch operand']
  #allocation3 [shape = 'f32[1,128]{1,0:T(1,128)}', space=vmem, size = 0x200, scoped, tag = 'scratch operand']
  %s0 = inlined_call_operand.hbm [shape: bf16[16,128], index: 0, kind: input, shape index: {}]
  %s1 = inlined_call_operand.hbm [shape: bf16[128,128], index: 1, kind: input, shape index: {}]
  %s2 = inlined_call_operand.vmem [shape: f32[1,128], index: 2, kind: input, shape index: {}]
  %s3 = inlined_call_operand.vmem [shape: f32[1,128], index: 3, kind: input, shape index: {}]
  %s4 = inlined_call_operand.hbm [shape: f32[1,128], index: 4, kind: output, shape index: {0}]
  %s5 = inlined_call_operand.hbm [shape: f32[1,128], index: 5, kind: output, shape index: {1}]
  %6 = xla_tuple %s4, %s5
  %s7 = sld [smem:[#allocation0]]
  $region50: #{tpu_custom_call.1} parent=0
    _
  %s9 = ssub.s32 1, %s7
  %s10 = scalar_select 0, %s9, %s7
  $region1: #{tpu_custom_call.1} parent=0
    #allocation4 [shape = 'u8[4096]{0}', space=vmem, size = 0x1000, scoped, tag = 'input window, operand 0, single buffered']
    #allocation5 [shape = 's32[1]{0}', space=sflag, size = 0x4, scoped, tag = 'scoped memory for tpu_custom_call.1']
    #allocation6 [shape = 's32[1]{0}', space=sflag, size = 0x4, scoped, tag = 'scoped memory for tpu_custom_call.1']
    #allocation7 [shape = 'u8[32768]{0}', space=vmem, size = 0x8000, scoped, tag = 'input window, operand 1, single buffered']
    #allocation8 [shape = 's32[1]{0}', space=sflag, size = 0x4, scoped, tag = 'scoped memory for tpu_custom_call.1']
    #allocation9 [shape = 'u8[512]{0}', space=vmem, size = 0x400, scoped, tag = 'output window, operand 0, single buffered']
    #allocation10 [shape = 'u8[512]{0}', space=vmem, size = 0x400, scoped, tag = 'output window, operand 1, single buffered']
    #allocation11 [shape = 's32[1]{0}', space=sflag, size = 0x4, scoped, tag = 'scoped memory for tpu_custom_call.1']
    %11 = vsyncpa [#allocation5], 0
    %12 = vsyncpa [#allocation8], 0
    %13 = vsyncpa [#allocation6], 0
    %14 = vsyncpa [#allocation11], 0
    // Predicated region
    $region2: #{tpu_custom_call.1} parent=1 // pred_check
      _
    $region3: #{tpu_custom_call.1} parent=1 // pred_check_branch
      %16 = sbr.rel (0) target = $region5
    $region4: #{tpu_custom_call.1} parent=1 // pred_region
      %s18 = ssub.s32 128, 128
      %19 = vsyncadd [#allocation5], %s18
      %s20 = sshll.u32 [#allocation4], 4
      %s21 = int_to_ptr.vmem [resolvable:$true] %s20
      %26 = dma.hbm_to_vmem [thread:$0]  %s0, 128, %s21, [#allocation5], 64, 64, 4
    $region5: #{tpu_custom_call.1} parent=1 // pred_fallthru
      _
    // Predicated region
    $region6: #{tpu_custom_call.1} parent=1 // pred_check
      _
    $region7: #{tpu_custom_call.1} parent=1 // pred_check_branch
      %28 = sbr.rel (0) target = $region9
    $region8: #{tpu_custom_call.1} parent=1 // pred_region
      %s30 = ssub.s32 1024, 1024
      %31 = vsyncadd [#allocation8], %s30
      %s32 = sshll.u32 [#allocation7], 4
      %s33 = int_to_ptr.vmem [resolvable:$true] %s32
      %38 = dma.hbm_to_vmem [thread:$0]  %s1, 1024, %s33, [#allocation8], 64, 64, 4
    $region9: #{tpu_custom_call.1} parent=1 // pred_fallthru
      _
    // Predicated region
    $region10: #{tpu_custom_call.1} parent=1 // pred_check
      _
    $region11: #{tpu_custom_call.1} parent=1 // pred_check_branch
      %40 = sbr.rel (0) target = $region13
    $region12: #{tpu_custom_call.1} parent=1 // pred_region
      _
    $region13: #{tpu_custom_call.1} parent=1 // pred_fallthru
      _
    // Predicated region
    $region14: #{tpu_custom_call.1} parent=1 // pred_check
      _
    $region15: #{tpu_custom_call.1} parent=1 // pred_check_branch
      %42 = sbr.rel (0) target = $region17
    $region16: #{tpu_custom_call.1} parent=1 // pred_region
      _
    $region17: #{tpu_custom_call.1} parent=1 // pred_fallthru
      _
    // Predicated region
    $region18: #{tpu_custom_call.1} parent=1 // pred_check
      _
    $region19: #{tpu_custom_call.1} parent=1 // pred_check_branch
      %44 = sbr.rel (0) target = $region21
    $region20: #{tpu_custom_call.1} parent=1 // pred_region
      %45 = dma.done [#allocation5], 128
    $region21: #{tpu_custom_call.1} parent=1 // pred_fallthru
      _
    // Predicated region
    $region22: #{tpu_custom_call.1} parent=1 // pred_check
      _
    $region23: #{tpu_custom_call.1} parent=1 // pred_check_branch
      %47 = sbr.rel (0) target = $region25
    $region24: #{tpu_custom_call.1} parent=1 // pred_region
      %48 = dma.done [#allocation8], 1024
    $region25: #{tpu_custom_call.1} parent=1 // pred_fallthru
      _
    %p50 = scmp.eq.s32.totalorder 0, 0
    // Predicated region
    $region26: #{tpu_custom_call.1} parent=1 // pred_check
      %p51 = pneg %p50
    $region27: #{tpu_custom_call.1} parent=1 // pred_check_branch
      %53 = sbr.rel (%p51) target = $region29
    $region28: #{tpu_custom_call.1} parent=1 // pred_region
      %54 = vst [vmem:[#allocation2] sm:$0x1] 0.0
      %55 = vst [vmem:[#allocation3] sm:$0x1] 0.0
    $region29: #{tpu_custom_call.1} parent=1 // pred_fallthru
      _
    %v56 = vld [vmem:[#allocation4] sm:$0xf]
    %v57 = vld [vmem:[#allocation4 + $0x4] sm:$0xf]
    %v58 = vld [vmem:[#allocation7] sm:$0xf]
    %v59 = vld [vmem:[#allocation7 + $0x4] sm:$0xf]
    %v60 = vld [vmem:[#allocation7 + $0x8] sm:$0xf]
    %v61 = vld [vmem:[#allocation7 + $0xc] sm:$0xf]
    %v62 = vld [vmem:[#allocation7 + $0x10] sm:$0xf]
    %v63 = vld [vmem:[#allocation7 + $0x14] sm:$0xf]
    %v64 = vld [vmem:[#allocation7 + $0x18] sm:$0xf]
    %v65 = vld [vmem:[#allocation7 + $0x1c] sm:$0xf]
    %v66 = vld [vmem:[#allocation7 + $0x20] sm:$0xf]
    %v67 = vld [vmem:[#allocation7 + $0x24] sm:$0xf]
    %v68 = vld [vmem:[#allocation7 + $0x28] sm:$0xf]
    %v69 = vld [vmem:[#allocation7 + $0x2c] sm:$0xf]
    %v70 = vld [vmem:[#allocation7 + $0x30] sm:$0xf]
    %v71 = vld [vmem:[#allocation7 + $0x34] sm:$0xf]
    %v72 = vld [vmem:[#allocation7 + $0x38] sm:$0xf]
    %v73 = vld [vmem:[#allocation7 + $0x3c] sm:$0xf]
    %v76 = vunpack.c.l.b16 %v56
    %v77 = vunpack.c.l.b16 %v57
    %v78 = vpack.c.b16 %v77, %v76
    %v96 = vunpack.c.l.b16 %v58
    %v97 = vunpack.c.l.b16 %v59
    %v98 = vunpack.c.l.b16 %v60
    %v99 = vunpack.c.l.b16 %v61
    %v100 = vunpack.c.l.b16 %v62
    %v101 = vunpack.c.l.b16 %v63
    %v102 = vunpack.c.l.b16 %v64
    %v103 = vunpack.c.l.b16 %v65
    %v104 = vunpack.c.l.b16 %v66
    %v105 = vunpack.c.l.b16 %v67
    %v106 = vunpack.c.l.b16 %v68
    %v107 = vunpack.c.l.b16 %v69
    %v108 = vunpack.c.l.b16 %v70
    %v109 = vunpack.c.l.b16 %v71
    %v110 = vunpack.c.l.b16 %v72
    %v111 = vunpack.c.l.b16 %v73
    %v112 = vpack.c.b16 %v97, %v96
    %v113 = vpack.c.b16 %v99, %v98
    %v114 = vpack.c.b16 %v101, %v100
    %v115 = vpack.c.b16 %v103, %v102
    %v116 = vpack.c.b16 %v105, %v104
    %v117 = vpack.c.b16 %v107, %v106
    %v118 = vpack.c.b16 %v109, %v108
    %v119 = vpack.c.b16 %v111, %v110
    %128 = vmatprep.subr.bf16.mxu0 0
    %129 = vmatpush1.bf16.msra.mxu0 %v112
    %130 = vmatprep.subr.bf16.mxu0 0
    %131 = vmatpush1.bf16.msra.mxu0 %v113
    %132 = vmatprep.subr.bf16.mxu0 0
    %133 = vmatpush1.bf16.msra.mxu0 %v114
    %134 = vmatprep.subr.bf16.mxu0 0
    %135 = vmatpush1.bf16.msra.mxu0 %v115
    %136 = vmatprep.subr.bf16.mxu0 0
    %137 = vmatpush1.bf16.msra.mxu0 %v116
    %138 = vmatprep.subr.bf16.mxu0 0
    %139 = vmatpush1.bf16.msra.mxu0 %v117
    %140 = vmatprep.subr.bf16.mxu0 0
    %141 = vmatpush1.bf16.msra.mxu0 %v118
    %142 = vmatprep.subr.bf16.mxu0 0
    %143 = vmatpush1.bf16.msra.mxu0 %v119
    %144 = vmatprep.subr.bf16.mxu0 0
    %145 = vmatpush1.bf16.msra.mxu0 0
    %146 = vmatprep.subr.bf16.mxu0 0
    %147 = vmatpush1.bf16.msra.mxu0 0
    %148 = vmatprep.subr.bf16.mxu0 0
    %149 = vmatpush1.bf16.msra.mxu0 0
    %150 = vmatprep.subr.bf16.mxu0 0
    %151 = vmatpush1.bf16.msra.mxu0 0
    %152 = vmatprep.subr.bf16.mxu0 0
    %153 = vmatpush1.bf16.msra.mxu0 0
    %154 = vmatprep.subr.bf16.mxu0 0
    %155 = vmatpush1.bf16.msra.mxu0 0
    %156 = vmatprep.subr.bf16.mxu0 0
    %157 = vmatpush1.bf16.msra.mxu0 0
    %158 = vmatprep.subr.bf16.mxu0 0
    %159 = vmatpush1.bf16.msra.mxu0 0
    %160 = vmatprep.mubr.bf16.mxu0 0
    %161 = vmatmul.mubr.bf16.gmra.mrb[0].mxu0 %v78
    %v162 = vpop.f32.mrb[0].mxu0
    %v163 = vadd.f32 0.0, %v162
    %v164 = vpop.f32.mrb[0].mxu0
    %v165 = vpop.f32.mrb[0].mxu0
    %v166 = vadd.f32 0.0, %v165
    %v167 = vpop.f32.mrb[0].mxu0
    %168 = vdwg.mxu0
    %v169 = vld [vmem:[#allocation2] sm:$0x1]
    %v170 = vadd.f32 %v163, %v166
    %v171 = vrot.slane %v170, 4
    %v172 = vadd.f32 %v170, %v171
    %v173 = vrot.slane %v172, 2
    %v174 = vadd.f32 %v172, %v173
    %v175 = vrot.slane %v174, 1
    %v176 = vadd.f32 %v174, %v175
    %v177 = vadd.f32 %v169, %v176
    %178 = vst [vmem:[#allocation2] sm:$0x1] %v177
    %v179 = vld [vmem:[#allocation3] sm:$0x1]
    %v180 = vmul.f32 %v163, %v163
    %v181 = vmul.f32 %v166, %v166
    %v182 = vadd.f32 %v180, %v181
    %v183 = vrot.slane %v182, 4
    %v184 = vadd.f32 %v182, %v183
    %v185 = vrot.slane %v184, 2
    %v186 = vadd.f32 %v184, %v185
    %v187 = vrot.slane %v186, 1
    %v188 = vadd.f32 %v186, %v187
    %v189 = vadd.f32 %v179, %v188
    %190 = vst [vmem:[#allocation3] sm:$0x1] %v189
    // Predicated region
    $region30: #{tpu_custom_call.1} parent=1 // pred_check
      %p191 = pneg %p50
    $region31: #{tpu_custom_call.1} parent=1 // pred_check_branch
      %193 = sbr.rel (%p191) target = $region33
    $region32: #{tpu_custom_call.1} parent=1 // pred_region
      %v194 = vld [vmem:[#allocation2] sm:$0x1]
      %v195 = vmul.f32 %v194, 0.0625
      %v196 = vld [vmem:[#allocation3] sm:$0x1]
      %v197 = vmul.f32 %v196, 0.0625
      %v198 = vmul.f32 %v195, %v195
      %v199 = vsub.f32 %v197, %v198
      %v200 = vmax.f32 %v199, 0.0
      %v201 = vld [vmem:[%s2] sm:$0x1]
      %v202 = vadd.f32 %v200, 1e-05
      %v203 = vrsqrt.pop %v202
      %v204 = vmul.f32 %v201, %v203
      %v205 = vld [vmem:[%s3] sm:$0x1]
      %v206 = vmul.f32 %v195, %v204
      %v207 = vsub.f32 %v205, %v206
      %208 = vst [vmem:[#allocation9] sm:$0x1] %v204
      %209 = vst [vmem:[#allocation10] sm:$0x1] %v207
    $region33: #{tpu_custom_call.1} parent=1 // pred_fallthru
      _
    // Predicated region
    $region34: #{tpu_custom_call.1} parent=1 // pred_check
      _
    $region35: #{tpu_custom_call.1} parent=1 // pred_check_branch
      %211 = sbr.rel (0) target = $region37
    $region36: #{tpu_custom_call.1} parent=1 // pred_region
      %s213 = ssub.s32 16, 16
      %214 = vsyncadd [#allocation6], %s213
      %s216 = sshll.u32 [#allocation9], 4
      %s217 = int_to_ptr.vmem [resolvable:$true] %s216
      %219 = dma.vmem_to_hbm [thread:$0]  %s217, 16, %s4, [#allocation6]
    $region37: #{tpu_custom_call.1} parent=1 // pred_fallthru
      _
    // Predicated region
    $region38: #{tpu_custom_call.1} parent=1 // pred_check
      _
    $region39: #{tpu_custom_call.1} parent=1 // pred_check_branch
      %221 = sbr.rel (0) target = $region41
    $region40: #{tpu_custom_call.1} parent=1 // pred_region
      %s223 = ssub.s32 16, 16
      %224 = vsyncadd [#allocation11], %s223
      %s226 = sshll.u32 [#allocation10], 4
      %s227 = int_to_ptr.vmem [resolvable:$true] %s226
      %229 = dma.vmem_to_hbm [thread:$0]  %s227, 16, %s5, [#allocation11]
    $region41: #{tpu_custom_call.1} parent=1 // pred_fallthru
      _
    // Predicated region
    $region42: #{tpu_custom_call.1} parent=1 // pred_check
      _
    $region43: #{tpu_custom_call.1} parent=1 // pred_check_branch
      %231 = sbr.rel (0) target = $region45
    $region44: #{tpu_custom_call.1} parent=1 // pred_region
      %232 = dma.done [#allocation6], 16
    $region45: #{tpu_custom_call.1} parent=1 // pred_fallthru
      _
    // Predicated region
    $region46: #{tpu_custom_call.1} parent=1 // pred_check
      _
    $region47: #{tpu_custom_call.1} parent=1 // pred_check_branch
      %234 = sbr.rel (0) target = $region49
    $region48: #{tpu_custom_call.1} parent=1 // pred_region
      %235 = dma.done [#allocation11], 16
    $region49: #{tpu_custom_call.1} parent=1 // pred_fallthru
      _
    %236 = vsyncpa [#allocation5], 1
    %237 = vsyncpa [#allocation8], 1
    %238 = vsyncpa [#allocation6], 1
    %239 = vsyncpa [#allocation11], 1

</llo_original>
